<compile_context>
chip_gen: v7x
topology: tpu7x:2x2x1
jax: 0.10.0
libtpu: 0.0.40
codegen_flags: <defaults>
</compile_context>

<pallas_src>
import jax
import jax.numpy as jnp
from jax.experimental import pallas as pl
from jax.experimental.pallas import tpu as pltpu


LN_EPS = 1e-5  # PyTorch nn.LayerNorm default


def _round_up(x, m):
    return ((x + m - 1) // m) * m


def _cdiv(a, b):
    return -(-a // b)


def _vmem_budget_bytes():
    """~80% of physical per-core VMEM; conservative v7x fallback (64 MiB)."""
    phys = 64 * 1024 * 1024
    try:
        info = pltpu.get_tpu_info()
        for attr in ("vmem_capacity_bytes", "vmem_bytes", "vmem_size_bytes"):
            v = getattr(info, attr, None)
            if isinstance(v, int) and v > 0:
                phys = v
                break
    except Exception:
        pass
    return int(phys * 0.80)


def _pick_tile_n(D, max_tn):
    """Largest divisor of D that is a multiple of 256 (preferred) or 128."""
    cap = min(max_tn, D)
    for step in (256, 128):
        t = (cap // step) * step
        while t >= step:
            if D % t == 0:
                return t
            t -= step
    return D  # D not a multiple of 128: single full-extent block


# --------------------------------------------------------------------------- #
# Kernels
# --------------------------------------------------------------------------- #
def ln_linear_resident_kernel(x_ref, gamma_ref, beta_ref, w_ref, b_ref, o_ref):
    # x_ref: (TM, D); gamma/beta/b: (1, D) f32; w_ref: (D, D) bf16 (in, out); o_ref: (TM, D)
    x = x_ref[...].astype(jnp.float32)
    mean = jnp.mean(x, axis=-1, keepdims=True)
    xc = x - mean
    var = jnp.mean(xc * xc, axis=-1, keepdims=True)        # biased, like PyTorch
    xn = xc * jax.lax.rsqrt(var + LN_EPS)
    y = (xn * gamma_ref[...] + beta_ref[...]).astype(w_ref.dtype)
    acc = jnp.dot(y, w_ref[...], preferred_element_type=jnp.float32)
    o_ref[...] = (acc + b_ref[...]).astype(o_ref.dtype)


def ln_linear_stream_kernel(x_ref, gamma_ref, beta_ref, w_ref, b_ref, o_ref, y_ref):
    # x_ref: (TM, D); w_ref: (D, TN) bf16; b_ref: (1, TN) f32; o_ref: (TM, TN)
    # y_ref: (TM, D) VMEM scratch holding the LayerNorm'd rows (compute dtype)
    j = pl.program_id(1)

    @pl.when(j == 0)
    def _():
        x = x_ref[...].astype(jnp.float32)
        mean = jnp.mean(x, axis=-1, keepdims=True)
        xc = x - mean
        var = jnp.mean(xc * xc, axis=-1, keepdims=True)
        xn = xc * jax.lax.rsqrt(var + LN_EPS)
        y_ref[...] = (xn * gamma_ref[...] + beta_ref[...]).astype(y_ref.dtype)

    acc = jnp.dot(y_ref[...], w_ref[...], preferred_element_type=jnp.float32)
    o_ref[...] = (acc + b_ref[...]).astype(o_ref.dtype)


# --------------------------------------------------------------------------- #
# Wrapper
# --------------------------------------------------------------------------- #
def linear_encoder_forward(inputs_embeds, gamma, beta, weight, bias, *,
                           tile_m=512, tile_n=512, compute_dtype=jnp.bfloat16):
    """inputs_embeds: (B, S, D); weight: (D, D) PyTorch (out, in); bias: (D,).

    LayerNorm statistics and the matmul accumulator are f32; MXU operands
    (normalized activations + weight) use `compute_dtype` (bf16 by default).
    """
    B, S, D = inputs_embeds.shape
    M = B * S
    x2d = inputs_embeds.reshape(M, D)
    out_dtype = inputs_embeds.dtype

    x_bytes = jnp.dtype(x2d.dtype).itemsize
    out_bytes = jnp.dtype(out_dtype).itemsize
    w_bytes = jnp.dtype(compute_dtype).itemsize

    # Adaptive row tile: large by default; for small M split into >=2 row tiles
    # so both TensorCores (v7x megacore) get work. Always a multiple of 8.
    tm = min(tile_m, max(8, _round_up(_cdiv(M, 2), 8)))
    grid_m = _cdiv(M, tm)  # partial trailing block is masked by Pallas

    # Tiny params: pre-cast once in the wrapper.
    gamma32 = gamma.astype(jnp.float32).reshape(1, D)
    beta32 = beta.astype(jnp.float32).reshape(1, D)
    bias32 = bias.astype(jnp.float32).reshape(1, D)
    # One-time transpose to (in, out) + cast to the MXU compute dtype (fused by
    # XLA): canonical y @ Wt contraction, no per-slab transposes in the kernel.
    w_t = weight.T.astype(compute_dtype)

    budget = _vmem_budget_bytes()
    params_bytes = 2 * 3 * D * 4  # gamma/beta/bias f32 rows, double-buffer slack

    resident_plan = (2 * tm * D * x_bytes      # x block (double-buffered)
                     + 2 * D * D * w_bytes     # resident weight (budget 2 bufs)
                     + 2 * tm * D * out_bytes  # output tile
                     + params_bytes)

    if resident_plan <= budget:
        # ---- resident-weight path: weight DMA'd once for the whole grid -----
        vmem_limit = min(budget, max(resident_plan + (4 << 20), 32 << 20))
        out2d = pl.pallas_call(
            ln_linear_resident_kernel,
            out_shape=jax.ShapeDtypeStruct((M, D), out_dtype),
            grid_spec=pltpu.PrefetchScalarGridSpec(
                num_scalar_prefetch=0,
                grid=(grid_m,),
                in_specs=[
                    pl.BlockSpec((tm, D), lambda i: (i, 0)),   # x rows
                    pl.BlockSpec((1, D), lambda i: (0, 0)),    # gamma (f32)
                    pl.BlockSpec((1, D), lambda i: (0, 0)),    # beta  (f32)
                    pl.BlockSpec((D, D), lambda i: (0, 0)),    # weight: constant -> fetched once
                    pl.BlockSpec((1, D), lambda i: (0, 0)),    # bias  (f32)
                ],
                out_specs=pl.BlockSpec((tm, D), lambda i: (i, 0)),
            ),
            compiler_params=pltpu.CompilerParams(
                dimension_semantics=("parallel",),
                vmem_limit_bytes=vmem_limit,
            ),
        )(x2d, gamma32, beta32, w_t, bias32)
        return out2d.reshape(B, S, D)

    # ---- streaming path: weight streamed as (D, tn) output-column slabs -----
    tn = _pick_tile_n(D, tile_n)
    stream_plan = (2 * tm * D * x_bytes
                   + 2 * D * tn * w_bytes
                   + 2 * tm * tn * out_bytes
                   + tm * D * w_bytes            # y scratch (compute dtype)
                   + params_bytes)
    vmem_limit = min(budget, max(stream_plan + (4 << 20), 32 << 20))
    grid = (grid_m, D // tn)

    out2d = pl.pallas_call(
        ln_linear_stream_kernel,
        out_shape=jax.ShapeDtypeStruct((M, D), out_dtype),
        grid_spec=pltpu.PrefetchScalarGridSpec(
            num_scalar_prefetch=0,
            grid=grid,
            in_specs=[
                pl.BlockSpec((tm, D), lambda i, j: (i, 0)),    # x rows
                pl.BlockSpec((1, D), lambda i, j: (0, 0)),     # gamma (f32)
                pl.BlockSpec((1, D), lambda i, j: (0, 0)),     # beta  (f32)
                pl.BlockSpec((D, tn), lambda i, j: (0, j)),    # weight slab (in, out-cols)
                pl.BlockSpec((1, tn), lambda i, j: (0, j)),    # bias slab (f32)
            ],
            out_specs=pl.BlockSpec((tm, tn), lambda i, j: (i, j)),
            scratch_shapes=[pltpu.VMEM((tm, D), compute_dtype)],
        ),
        compiler_params=pltpu.CompilerParams(
            # Row axis shards across TensorCores; the N axis stays sequential so
            # the LayerNorm scratch carries across its iterations.
            dimension_semantics=("parallel", "arbitrary"),
            vmem_limit_bytes=vmem_limit,
        ),
    )(x2d, gamma32, beta32, w_t, bias32)
    return out2d.reshape(B, S, D)


class ResultsObj:
    def __init__(self):
        self.last_hidden_state = None

    def set_results(self, results):
        self.last_hidden_state = results


def linear_encoder(inputs_embeds, params):
    """Mirrors LinearEncoder.forward: returns an object with .last_hidden_state."""
    out = linear_encoder_forward(
        inputs_embeds,
        params["ln_gamma"], params["ln_beta"],
        params["lin_weight"], params["lin_bias"],
    )
    res = ResultsObj()
    res.set_results(out)
    return res


if __name__ == "__main__":
    # Small but lane-dense demo shapes (d_model multiple of 128).
    B, S, D = 2, 8, 128
    key = jax.random.PRNGKey(0)
    k_x, k_w, k_b = jax.random.split(key, 3)

    inputs_embeds = jax.random.normal(k_x, (B, S, D), dtype=jnp.float32)

    # PyTorch defaults: LN gamma=1, beta=0; Linear weight/bias ~ U(-1/sqrt(D), 1/sqrt(D)).
    bound = 1.0 / (D ** 0.5)
    params = {
        "ln_gamma": jnp.ones((D,), jnp.float32),
        "ln_beta": jnp.zeros((D,), jnp.float32),
        "lin_weight": jax.random.uniform(k_w, (D, D), jnp.float32, -bound, bound),
        "lin_bias": jax.random.uniform(k_b, (D,), jnp.float32, -bound, bound),
    }

    res = linear_encoder(inputs_embeds, params)
    out = jax.block_until_ready(res.last_hidden_state)
    assert out.shape == (B, S, D)

    # References in plain JAX.
    x = inputs_embeds
    mean = jnp.mean(x, axis=-1, keepdims=True)
    var = jnp.mean((x - mean) ** 2, axis=-1, keepdims=True)
    xn = (x - mean) / jnp.sqrt(var + LN_EPS)
    y = xn * params["ln_gamma"] + params["ln_beta"]

    # (a) f32 reference (module semantics), loose tolerance for bf16 MXU operands.
    ref_f32 = y @ params["lin_weight"].T + params["lin_bias"]
    assert jnp.allclose(out, ref_f32, atol=6e-2, rtol=6e-2), "mismatch vs f32 reference"

    # (b) bf16-operand emulation (what the kernel actually computes), tighter tolerance.
    y_bf = y.astype(jnp.bfloat16).astype(jnp.float32)
    w_bf = params["lin_weight"].astype(jnp.bfloat16).astype(jnp.float32)
    ref_bf = y_bf @ w_bf.T + params["lin_bias"]
    assert jnp.allclose(out, ref_bf, atol=1e-2, rtol=1e-2), "mismatch vs bf16-emulated reference"

    print("KERNEL_OK")
</pallas_src>

<mosaic_0001>
module attributes {stable_mosaic.version = 11 : i64} {
  func.func @ln_linear_resident_kernel(%arg0: i32, %arg1: memref<8x128xf32, #tpu.memory_space<vmem>>, %arg2: memref<1x128xf32, #tpu.memory_space<vmem>>, %arg3: memref<1x128xf32, #tpu.memory_space<vmem>>, %arg4: memref<128x128xbf16, #tpu.memory_space<vmem>>, %arg5: memref<1x128xf32, #tpu.memory_space<vmem>>, %arg6: memref<8x128xf32, #tpu.memory_space<vmem>>) attributes {dimension_semantics = [#tpu.dimension_semantics<parallel>], iteration_bounds = array<i64: 2>, scalar_prefetch = 0 : i64, scratch_operands = 0 : i64, tpu.core_type = #tpu.core_type<tc>, window_params = [{transform_indices = @transform_0, window_bounds = array<i64: 8, 128>}, {pipeline_mode = #tpu.pipeline_mode<synchronous>, transform_indices = @transform_1, window_bounds = array<i64: 1, 128>}, {pipeline_mode = #tpu.pipeline_mode<synchronous>, transform_indices = @transform_2, window_bounds = array<i64: 1, 128>}, {pipeline_mode = #tpu.pipeline_mode<synchronous>, transform_indices = @transform_3, window_bounds = array<i64: 128, 128>}, {pipeline_mode = #tpu.pipeline_mode<synchronous>, transform_indices = @transform_4, window_bounds = array<i64: 1, 128>}, {transform_indices = @transform_5, window_bounds = array<i64: 8, 128>}]} {
    %c0 = arith.constant 0 : index
    %c0_0 = arith.constant 0 : index
    %0 = vector.load %arg1[%c0, %c0_0] : memref<8x128xf32, #tpu.memory_space<vmem>>, vector<8x128xf32>
    %cst = arith.constant dense<0.000000e+00> : vector<8xf32>
    %1 = vector.multi_reduction <add>, %0, %cst [1] : vector<8x128xf32> to vector<8xf32>
    %2 = vector.shape_cast %1 : vector<8xf32> to vector<8x1xf32>
    %cst_1 = arith.constant 1.280000e+02 : f32
    %3 = vector.broadcast %cst_1 : f32 to vector<8x1xf32>
    %4 = arith.divf %2, %3 : vector<8x1xf32>
    %5 = vector.broadcast %4 : vector<8x1xf32> to vector<8x128xf32>
    %6 = arith.subf %0, %5 : vector<8x128xf32>
    %7 = arith.mulf %6, %6 : vector<8x128xf32>
    %cst_2 = arith.constant dense<0.000000e+00> : vector<8xf32>
    %8 = vector.multi_reduction <add>, %7, %cst_2 [1] : vector<8x128xf32> to vector<8xf32>
    %9 = vector.shape_cast %8 : vector<8xf32> to vector<8x1xf32>
    %cst_3 = arith.constant 1.280000e+02 : f32
    %10 = vector.broadcast %cst_3 : f32 to vector<8x1xf32>
    %11 = arith.divf %9, %10 : vector<8x1xf32>
    %cst_4 = arith.constant 9.99999974E-6 : f32
    %12 = vector.broadcast %cst_4 : f32 to vector<8x1xf32>
    %13 = arith.addf %11, %12 : vector<8x1xf32>
    %14 = math.rsqrt %13 : vector<8x1xf32>
    %15 = vector.broadcast %14 : vector<8x1xf32> to vector<8x128xf32>
    %16 = arith.mulf %6, %15 : vector<8x128xf32>
    %c0_5 = arith.constant 0 : index
    %c0_6 = arith.constant 0 : index
    %17 = vector.load %arg2[%c0_5, %c0_6] : memref<1x128xf32, #tpu.memory_space<vmem>>, vector<1x128xf32>
    %18 = vector.broadcast %17 : vector<1x128xf32> to vector<8x128xf32>
    %19 = arith.mulf %16, %18 : vector<8x128xf32>
    %c0_7 = arith.constant 0 : index
    %c0_8 = arith.constant 0 : index
    %20 = vector.load %arg3[%c0_7, %c0_8] : memref<1x128xf32, #tpu.memory_space<vmem>>, vector<1x128xf32>
    %21 = vector.broadcast %20 : vector<1x128xf32> to vector<8x128xf32>
    %22 = arith.addf %19, %21 : vector<8x128xf32>
    %23 = arith.truncf %22 : vector<8x128xf32> to vector<8x128xbf16>
    %c0_9 = arith.constant 0 : index
    %c0_10 = arith.constant 0 : index
    %24 = vector.load %arg4[%c0_9, %c0_10] : memref<128x128xbf16, #tpu.memory_space<vmem>>, vector<128x128xbf16>
    %cst_11 = arith.constant dense<0.000000e+00> : vector<8x128xf32>
    %25 = tpu.matmul %23, %24, %cst_11 {dimension_numbers = #tpu.dot_dimension_numbers<[1], [0], [0], [1], [0, 0, 1, 1], [], []>} : vector<8x128xbf16>, vector<128x128xbf16>, vector<8x128xf32> -> vector<8x128xf32>
    %c0_12 = arith.constant 0 : index
    %c0_13 = arith.constant 0 : index
    %26 = vector.load %arg5[%c0_12, %c0_13] : memref<1x128xf32, #tpu.memory_space<vmem>>, vector<1x128xf32>
    %27 = vector.broadcast %26 : vector<1x128xf32> to vector<8x128xf32>
    %28 = arith.addf %25, %27 : vector<8x128xf32>
    %c0_14 = arith.constant 0 : index
    %c0_15 = arith.constant 0 : index
    %29 = vector.load %arg6[%c0_14, %c0_15] : memref<8x128xf32, #tpu.memory_space<vmem>>, vector<8x128xf32>
    tpu.vector_store %arg6[%c0_14, %c0_15], %28 {strides = array<i32>} : memref<8x128xf32, #tpu.memory_space<vmem>>, vector<8x128xf32>,
    return
  }
  func.func @transform_0(%arg0: i32) -> (i32, i32) {
    %c0_i32 = arith.constant 0 : i32
    %c0_i32_0 = arith.constant 0 : i32
    return %arg0, %c0_i32 : i32, i32
  }
  func.func @transform_1(%arg0: i32) -> (i32, i32) {
    %c0_i32 = arith.constant 0 : i32
    %c0_i32_0 = arith.constant 0 : i32
    %c0_i32_1 = arith.constant 0 : i32
    return %c0_i32, %c0_i32_0 : i32, i32
  }
  func.func @transform_2(%arg0: i32) -> (i32, i32) {
    %c0_i32 = arith.constant 0 : i32
    %c0_i32_0 = arith.constant 0 : i32
    %c0_i32_1 = arith.constant 0 : i32
    return %c0_i32, %c0_i32_0 : i32, i32
  }
  func.func @transform_3(%arg0: i32) -> (i32, i32) {
    %c0_i32 = arith.constant 0 : i32
    %c0_i32_0 = arith.constant 0 : i32
    %c0_i32_1 = arith.constant 0 : i32
    return %c0_i32, %c0_i32_0 : i32, i32
  }
  func.func @transform_4(%arg0: i32) -> (i32, i32) {
    %c0_i32 = arith.constant 0 : i32
    %c0_i32_0 = arith.constant 0 : i32
    %c0_i32_1 = arith.constant 0 : i32
    return %c0_i32, %c0_i32_0 : i32, i32
  }
  func.func @transform_5(%arg0: i32) -> (i32, i32) {
    %c0_i32 = arith.constant 0 : i32
    %c0_i32_0 = arith.constant 0 : i32
    return %arg0, %c0_i32 : i32, i32
  }
}

</mosaic_0001>

<llo_original>
// kernel: tpu_custom_call.1
$region0: #{tpu_custom_call.1}
  #allocation0 [shape = 'u32[]', space=smem, size = 0x4, offset = 0x4, fixed_abs, tag = 'smem constant byte address 0x4 - core index']
  #allocation1 [shape = 'u32[144,128]{1,0:T(1,128)}', space=vmem, size = 0x12000, scoped, tag = 'internal scratch']
  %s0 = inlined_call_operand.hbm [shape: f32[16,128], index: 0, kind: input, shape index: {}]
  %s1 = inlined_call_operand.vmem [shape: f32[1,128], index: 1, kind: input, shape index: {}]
  %s2 = inlined_call_operand.vmem [shape: f32[1,128], index: 2, kind: input, shape index: {}]
  %s3 = inlined_call_operand.hbm [shape: bf16[128,128], index: 3, kind: input, shape index: {}]
  %s4 = inlined_call_operand.vmem [shape: f32[1,128], index: 4, kind: input, shape index: {}]
  %s5 = inlined_call_operand.hbm [shape: f32[16,128], index: 5, kind: output, shape index: {}]
  %s6 = sld [smem:[#allocation0]]
  $region61: #{tpu_custom_call.1} parent=0
    _
  %s8 = ssub.s32 1, %s6
  %s9 = scalar_select 0, %s8, %s6
  $region1: #{tpu_custom_call.1} parent=0
    #allocation2 [shape = 'u8[8192]{0}', space=vmem, size = 0x2000, scoped, tag = 'input window, operand 0']
    #allocation3 [shape = 's32[2]{0}', space=sflag, size = 0x8, scoped, tag = 'scoped memory for tpu_custom_call.1']
    #allocation4 [shape = 's32[2]{0}', space=sflag, size = 0x8, scoped, tag = 'scoped memory for tpu_custom_call.1']
    #allocation5 [shape = 'u8[32768]{0}', space=vmem, size = 0x8000, scoped, tag = 'input window, operand 3, single buffered']
    #allocation6 [shape = 's32[1]{0}', space=sflag, size = 0x4, scoped, tag = 'scoped memory for tpu_custom_call.1']
    #allocation7 [shape = 'u8[8192]{0}', space=vmem, size = 0x2000, scoped, tag = 'output window, operand 0']
    %10 = vsyncpa [#allocation3], 0
    %s11 = scalar_lea.sflag [#allocation3], 1
    %12 = vsyncpa %s11, 0
    %13 = vsyncpa [#allocation6], 0
    %14 = vsyncpa [#allocation4], 0
    %s15 = scalar_lea.sflag [#allocation4], 1
    %16 = vsyncpa %s15, 0
    loop: start=0, step=1, limit=4
    $region2: #{tpu_custom_call.1} parent=1 // loop_pre_header
      _
    $region3: #{tpu_custom_call.1} parent=1 // loop_header
      %s18 = sphi 0, %s22
      %p19 = scmp.ge.s32.totalorder %s18, 4
      %s28 = sphi 0, %s30
      %s31 = sphi 0, %s28
      %s32 = sphi 0, %s31
      %s48 = sphi 0, %s32
      %s52 = sphi 0, %s52
      %s54 = sphi 0, %s52
      %s55 = sphi 0, %s54
      %s69 = sphi 0, %s55
      %s73 = sphi 0, %s73
      %s75 = sphi 0, %s73
      %s76 = sphi 0, %s75
      %s90 = sphi 0, %s76
      %s94 = sphi 0, %s94
      %s96 = sphi 0, %s94
      %s97 = sphi 0, %s96
      %s111 = sphi 0, %s97
      %s115 = sphi 0, %s115
      %s117 = sphi 0, %s115
      %s118 = sphi 0, %s117
      %s132 = sphi 0, %s118
      %s138 = sphi 0, %s140
      %s141 = sphi 0, %s138
      %s142 = sphi 0, %s141
      %s158 = sphi 0, %s142
    $region4: #{tpu_custom_call.1} parent=1 // loop_header_branch
      %21 = sbr.rel (%p19) target = $region8
    $region5: #{tpu_custom_call.1} parent=1 // loop_body
      %s23 = ssub.s32 %s18, 1
      %s24 = ssub.s32 %s18, 2
      %s25 = sadd.s32 %s18, 1
      %s26 = ssub.s32 %s18, %s25
      %p27 = scmp.eq.s32.totalorder %s26, 0
      %s29 = sadd.s32 %s28, 1
      %s30 = scalar_select %p27, %s28, %s29
      %p33 = pneg %p27
      %p34 = scmp.eq.s32.totalorder %s18, 1
      %p35 = por %p33, %p34
      %p36 = scmp.ne.s32.totalorder %s28, %s31
      %p37 = scmp.eq.s32.totalorder %s18, 0
      %p38 = por %p36, %p37
      %p39 = scmp.ne.s32.totalorder %s28, %s31
      %p40 = scmp.eq.s32.totalorder %s23, 1
      %p41 = por %p39, %p40
      %p42 = scmp.ne.s32.totalorder %s31, %s32
      %p43 = scmp.eq.s32.totalorder %s23, 0
      %p44 = por %p42, %p43
      %p45 = scmp.ne.s32.totalorder %s31, %s32
      %p46 = scmp.eq.s32.totalorder %s24, 1
      %p47 = por %p45, %p46
      %p49 = scmp.ne.s32.totalorder %s32, %s48
      %p50 = scmp.eq.s32.totalorder %s24, 0
      %p51 = por %p49, %p50
      %s53 = sadd.s32 %s52, 1
      %p56 = scmp.eq.s32.totalorder %s18, 1
      %p57 = scmp.ne.s32.totalorder %s52, %s54
      %p58 = scmp.eq.s32.totalorder %s18, 0
      %p59 = por %p57, %p58
      %p60 = scmp.ne.s32.totalorder %s52, %s54
      %p61 = scmp.eq.s32.totalorder %s23, 1
      %p62 = por %p60, %p61
      %p63 = scmp.ne.s32.totalorder %s54, %s55
      %p64 = scmp.eq.s32.totalorder %s23, 0
      %p65 = por %p63, %p64
      %p66 = scmp.ne.s32.totalorder %s54, %s55
      %p67 = scmp.eq.s32.totalorder %s24, 1
      %p68 = por %p66, %p67
      %p70 = scmp.ne.s32.totalorder %s55, %s69
      %p71 = scmp.eq.s32.totalorder %s24, 0
      %p72 = por %p70, %p71
      %s74 = sadd.s32 %s73, 1
      %p77 = scmp.eq.s32.totalorder %s18, 1
      %p78 = scmp.ne.s32.totalorder %s73, %s75
      %p79 = scmp.eq.s32.totalorder %s18, 0
      %p80 = por %p78, %p79
      %p81 = scmp.ne.s32.totalorder %s73, %s75
      %p82 = scmp.eq.s32.totalorder %s23, 1
      %p83 = por %p81, %p82
      %p84 = scmp.ne.s32.totalorder %s75, %s76
      %p85 = scmp.eq.s32.totalorder %s23, 0
      %p86 = por %p84, %p85
      %p87 = scmp.ne.s32.totalorder %s75, %s76
      %p88 = scmp.eq.s32.totalorder %s24, 1
      %p89 = por %p87, %p88
      %p91 = scmp.ne.s32.totalorder %s76, %s90
      %p92 = scmp.eq.s32.totalorder %s24, 0
      %p93 = por %p91, %p92
      %s95 = sadd.s32 %s94, 1
      %p98 = scmp.eq.s32.totalorder %s18, 1
      %p99 = scmp.ne.s32.totalorder %s94, %s96
      %p100 = scmp.eq.s32.totalorder %s18, 0
      %p101 = por %p99, %p100
      %p102 = scmp.ne.s32.totalorder %s94, %s96
      %p103 = scmp.eq.s32.totalorder %s23, 1
      %p104 = por %p102, %p103
      %p105 = scmp.ne.s32.totalorder %s96, %s97
      %p106 = scmp.eq.s32.totalorder %s23, 0
      %p107 = por %p105, %p106
      %p108 = scmp.ne.s32.totalorder %s96, %s97
      %p109 = scmp.eq.s32.totalorder %s24, 1
      %p110 = por %p108, %p109
      %p112 = scmp.ne.s32.totalorder %s97, %s111
      %p113 = scmp.eq.s32.totalorder %s24, 0
      %p114 = por %p112, %p113
      %s116 = sadd.s32 %s115, 1
      %p119 = scmp.eq.s32.totalorder %s18, 1
      %p120 = scmp.ne.s32.totalorder %s115, %s117
      %p121 = scmp.eq.s32.totalorder %s18, 0
      %p122 = por %p120, %p121
      %p123 = scmp.ne.s32.totalorder %s115, %s117
      %p124 = scmp.eq.s32.totalorder %s23, 1
      %p125 = por %p123, %p124
      %p126 = scmp.ne.s32.totalorder %s117, %s118
      %p127 = scmp.eq.s32.totalorder %s23, 0
      %p128 = por %p126, %p127
      %p129 = scmp.ne.s32.totalorder %s117, %s118
      %p130 = scmp.eq.s32.totalorder %s24, 1
      %p131 = por %p129, %p130
      %p133 = scmp.ne.s32.totalorder %s118, %s132
      %p134 = scmp.eq.s32.totalorder %s24, 0
      %p135 = por %p133, %p134
      %s136 = ssub.s32 %s18, %s25
      %p137 = scmp.eq.s32.totalorder %s136, 0
      %s139 = sadd.s32 %s138, 1
      %s140 = scalar_select %p137, %s138, %s139
      %p143 = pneg %p137
      %p144 = scmp.eq.s32.totalorder %s18, 1
      %p145 = por %p143, %p144
      %p146 = scmp.ne.s32.totalorder %s138, %s141
      %p147 = scmp.eq.s32.totalorder %s18, 0
      %p148 = por %p146, %p147
      %p149 = scmp.ne.s32.totalorder %s138, %s141
      %p150 = scmp.eq.s32.totalorder %s23, 1
      %p151 = por %p149, %p150
      %p152 = scmp.ne.s32.totalorder %s141, %s142
      %p153 = scmp.eq.s32.totalorder %s23, 0
      %p154 = por %p152, %p153
      %p155 = scmp.ne.s32.totalorder %s141, %s142
      %p156 = scmp.eq.s32.totalorder %s24, 1
      %p157 = por %p155, %p156
      %p159 = scmp.ne.s32.totalorder %s142, %s158
      %p160 = scmp.eq.s32.totalorder %s24, 0
      %p161 = por %p159, %p160
      %p162 = scmp.le.s32.totalorder 1, %s18
      %p163 = scmp.lt.s32.totalorder %s18, 3
      %p164 = pnand %p162, %p163
      %p165 = pneg %p164
      // Predicated region
      $region9: #{tpu_custom_call.1} parent=5 // pred_check
        _
      $region10: #{tpu_custom_call.1} parent=5 // pred_check_branch
        %167 = sbr.rel (%p164) target = $region12
      $region11: #{tpu_custom_call.1} parent=5 // pred_region
        %s168 = ssub.s32 %s18, 1
        // Predicated region
        $region13: #{tpu_custom_call.1} parent=11 // pred_check
          %p169 = pneg %p65
        $region14: #{tpu_custom_call.1} parent=11 // pred_check_branch
          %171 = sbr.rel (%p169) target = $region16
        $region15: #{tpu_custom_call.1} parent=11 // pred_region
          _
        $region16: #{tpu_custom_call.1} parent=11 // pred_fallthru
          _
        // Predicated region
        $region17: #{tpu_custom_call.1} parent=11 // pred_check
          %p172 = pneg %p86
        $region18: #{tpu_custom_call.1} parent=11 // pred_check_branch
          %174 = sbr.rel (%p172) target = $region20
        $region19: #{tpu_custom_call.1} parent=11 // pred_region
          _
        $region20: #{tpu_custom_call.1} parent=11 // pred_fallthru
          _
        // Predicated region
        $region21: #{tpu_custom_call.1} parent=11 // pred_check
          %p175 = pneg %p107
        $region22: #{tpu_custom_call.1} parent=11 // pred_check_branch
          %177 = sbr.rel (%p175) target = $region24
        $region23: #{tpu_custom_call.1} parent=11 // pred_region
          %s179 = ssub.s32 1024, 1024
          %180 = vsyncadd [#allocation6], %s179
          %s181 = sshll.u32 [#allocation5], 4
          %s182 = int_to_ptr.vmem [resolvable:$true] %s181
          %187 = dma.hbm_to_vmem [thread:$0]  %s3, 1024, %s182, [#allocation6], 64, 64, 4
        $region24: #{tpu_custom_call.1} parent=11 // pred_fallthru
          _
        // Predicated region
        $region25: #{tpu_custom_call.1} parent=11 // pred_check
          %p188 = pneg %p128
        $region26: #{tpu_custom_call.1} parent=11 // pred_check_branch
          %190 = sbr.rel (%p188) target = $region28
        $region27: #{tpu_custom_call.1} parent=11 // pred_region
          _
        $region28: #{tpu_custom_call.1} parent=11 // pred_fallthru
          _
      $region12: #{tpu_custom_call.1} parent=5 // pred_fallthru
        _
      %p191 = scmp.lt.s32.totalorder %s18, 2
      // Predicated region
      $region29: #{tpu_custom_call.1} parent=5 // pred_check
        %p192 = pneg %p191
      $region30: #{tpu_custom_call.1} parent=5 // pred_check_branch
        %194 = sbr.rel (%p192) target = $region32
      $region31: #{tpu_custom_call.1} parent=5 // pred_region
        // Predicated region
        $region33: #{tpu_custom_call.1} parent=31 // pred_check
          %p195 = pneg %p38
        $region34: #{tpu_custom_call.1} parent=31 // pred_check_branch
          %197 = sbr.rel (%p195) target = $region36
        $region35: #{tpu_custom_call.1} parent=31 // pred_region
          %s198 = sand.u32 %s28, 1
          %s199 = scalar_lea.sflag [#allocation3], %s198
          %s200 = sand.u32 %s28, 1
          %s201 = smul.addr %s200, 8
          %s202 = scalar_lea.vmem [#allocation2], %s201
          %s204 = ssub.s32 128, 128
          %205 = vsyncadd %s199, %s204
          %s206 = smul.addr %s18, 128
          %s207 = scalar_lea.hbm %s0, %s206
          %s209 = sshll.u32 %s202, 4
          %s210 = int_to_ptr.vmem [resolvable:$true] %s209
          %212 = dma.hbm_to_vmem [thread:$0]  %s207, 128, %s210, %s199
        $region36: #{tpu_custom_call.1} parent=31 // pred_fallthru
          _
      $region32: #{tpu_custom_call.1} parent=5 // pred_fallthru
        _
      %p213 = scmp.le.s32.totalorder 1, %s18
      %p214 = scmp.lt.s32.totalorder %s18, 3
      %p215 = pnand %p213, %p214
      %p216 = pneg %p215
      // Predicated region
      $region37: #{tpu_custom_call.1} parent=5 // pred_check
        _
      $region38: #{tpu_custom_call.1} parent=5 // pred_check_branch
        %218 = sbr.rel (%p215) target = $region40
      $region39: #{tpu_custom_call.1} parent=5 // pred_region
        %s219 = ssub.s32 %s18, 1
        %s220 = sand.u32 %s31, 1
        %s221 = scalar_lea.sflag [#allocation3], %s220
        %s222 = sand.u32 %s31, 1
        %s223 = smul.addr %s222, 8
        %s224 = scalar_lea.vmem [#allocation2], %s223
        // Predicated region
        $region41: #{tpu_custom_call.1} parent=39 // pred_check
          %p225 = pneg %p44
        $region42: #{tpu_custom_call.1} parent=39 // pred_check_branch
          %227 = sbr.rel (%p225) target = $region44
        $region43: #{tpu_custom_call.1} parent=39 // pred_region
          %228 = dma.done %s221, 128
        $region44: #{tpu_custom_call.1} parent=39 // pred_fallthru
          _
        // Predicated region
        $region45: #{tpu_custom_call.1} parent=39 // pred_check
          %p229 = pneg %p107
        $region46: #{tpu_custom_call.1} parent=39 // pred_check_branch
          %231 = sbr.rel (%p229) target = $region48
        $region47: #{tpu_custom_call.1} parent=39 // pred_region
          %232 = dma.done [#allocation6], 1024
        $region48: #{tpu_custom_call.1} parent=39 // pred_fallthru
          _
        %s233 = sand.u32 %s31, 1
        %s234 = scalar_lea.sflag [#allocation3], %s233
        %s235 = sand.u32 %s31, 1
        %s236 = smul.addr %s235, 8
        %s237 = scalar_lea.vmem [#allocation2], %s236
        %p238 = pneg %p44
        %p239 = pneg %p41
        %p240 = pneg %p65
        %p241 = pneg %p62
        %p242 = pneg %p86
        %p243 = pneg %p83
        %p244 = pneg %p107
        %p245 = pneg %p104
        %p246 = pneg %p128
        %p247 = pneg %p125
        %p248 = pneg %p154
        %p249 = pneg %p151
        %s250 = sand.u32 %s141, 1
        %s251 = scalar_lea.sflag [#allocation4], %s250
        %s252 = sand.u32 %s141, 1
        %s253 = smul.addr %s252, 8
        %s254 = scalar_lea.vmem [#allocation7], %s253
        %v256 = vld [vmem:[%s224] sm:$0xff]
        %257 = vadd.xlane.f32.xlu0 %v256
        %v258 = vpop.xlane.xlu0 %257
        %v259 = vrcp.pop 128.0
        %v260 = vmul.f32 %v258, %v259
        %v261 = vsub.f32 %v256, %v260
        %v262 = vmul.f32 %v261, %v261
        %263 = vadd.xlane.f32.xlu0 %v262
        %v264 = vpop.xlane.xlu0 %263
        %v265 = vmul.f32 %v264, %v259
        %v266 = vadd.f32 %v265, 1e-05
        %v267 = vrsqrt.pop %v266
        %v268 = vmul.f32 %v261, %v267
        %v269 = vld [vmem:[%s1] sm:$0x1]
        %v271 = vlaneseq
        %v272 = vshrl.u32 %v271, 7
        %v273 = vsub.s32 0, %v272
        %v274 = vrot.slane %v269, %v273
        %v276 = vmul.f32 %v268, %v274
        %v277 = vld [vmem:[%s2] sm:$0x1]
        %v279 = vlaneseq
        %v280 = vshrl.u32 %v279, 7
        %v281 = vsub.s32 0, %v280
        %v282 = vrot.slane %v277, %v281
        %v284 = vadd.f32 %v276, %v282
        %v285 = vpack.c.bf16 %v284, %v284
        %v286 = vld [vmem:[#allocation5] sm:$0xf]
        %v287 = vld [vmem:[#allocation5 + $0x4] sm:$0xf]
        %v288 = vld [vmem:[#allocation5 + $0x8] sm:$0xf]
        %v289 = vld [vmem:[#allocation5 + $0xc] sm:$0xf]
        %v290 = vld [vmem:[#allocation5 + $0x10] sm:$0xf]
        %v291 = vld [vmem:[#allocation5 + $0x14] sm:$0xf]
        %v292 = vld [vmem:[#allocation5 + $0x18] sm:$0xf]
        %v293 = vld [vmem:[#allocation5 + $0x1c] sm:$0xf]
        %v294 = vld [vmem:[#allocation5 + $0x20] sm:$0xf]
        %v295 = vld [vmem:[#allocation5 + $0x24] sm:$0xf]
        %v296 = vld [vmem:[#allocation5 + $0x28] sm:$0xf]
        %v297 = vld [vmem:[#allocation5 + $0x2c] sm:$0xf]
        %v298 = vld [vmem:[#allocation5 + $0x30] sm:$0xf]
        %v299 = vld [vmem:[#allocation5 + $0x34] sm:$0xf]
        %v300 = vld [vmem:[#allocation5 + $0x38] sm:$0xf]
        %v301 = vld [vmem:[#allocation5 + $0x3c] sm:$0xf]
        %v302 = vld [vmem:[%s4] sm:$0x1]
        %v304 = vlaneseq
        %v305 = vshrl.u32 %v304, 7
        %v306 = vsub.s32 0, %v305
        %v307 = vrot.slane %v302, %v306
        %v325 = vunpack.c.l.b16 %v286
        %v326 = vunpack.c.l.b16 %v287
        %v327 = vunpack.c.l.b16 %v288
        %v328 = vunpack.c.l.b16 %v289
        %v329 = vunpack.c.l.b16 %v290
        %v330 = vunpack.c.l.b16 %v291
        %v331 = vunpack.c.l.b16 %v292
        %v332 = vunpack.c.l.b16 %v293
        %v333 = vunpack.c.l.b16 %v294
        %v334 = vunpack.c.l.b16 %v295
        %v335 = vunpack.c.l.b16 %v296
        %v336 = vunpack.c.l.b16 %v297
        %v337 = vunpack.c.l.b16 %v298
        %v338 = vunpack.c.l.b16 %v299
        %v339 = vunpack.c.l.b16 %v300
        %v340 = vunpack.c.l.b16 %v301
        %v341 = vpack.c.b16 %v326, %v325
        %v342 = vpack.c.b16 %v328, %v327
        %v343 = vpack.c.b16 %v330, %v329
        %v344 = vpack.c.b16 %v332, %v331
        %v345 = vpack.c.b16 %v334, %v333
        %v346 = vpack.c.b16 %v336, %v335
        %v347 = vpack.c.b16 %v338, %v337
        %v348 = vpack.c.b16 %v340, %v339
        %357 = vmatprep.subr.bf16.mxu0 0
        %358 = vmatpush1.bf16.msra.mxu0 %v341
        %359 = vmatprep.subr.bf16.mxu0 0
        %360 = vmatpush1.bf16.msra.mxu0 %v342
        %361 = vmatprep.subr.bf16.mxu0 0
        %362 = vmatpush1.bf16.msra.mxu0 %v343
        %363 = vmatprep.subr.bf16.mxu0 0
        %364 = vmatpush1.bf16.msra.mxu0 %v344
        %365 = vmatprep.subr.bf16.mxu0 0
        %366 = vmatpush1.bf16.msra.mxu0 %v345
        %367 = vmatprep.subr.bf16.mxu0 0
        %368 = vmatpush1.bf16.msra.mxu0 %v346
        %369 = vmatprep.subr.bf16.mxu0 0
        %370 = vmatpush1.bf16.msra.mxu0 %v347
        %371 = vmatprep.subr.bf16.mxu0 0
        %372 = vmatpush1.bf16.msra.mxu0 %v348
        %373 = vmatprep.subr.bf16.mxu0 0
        %374 = vmatpush1.bf16.msra.mxu0 0
        %375 = vmatprep.subr.bf16.mxu0 0
        %376 = vmatpush1.bf16.msra.mxu0 0
        %377 = vmatprep.subr.bf16.mxu0 0
        %378 = vmatpush1.bf16.msra.mxu0 0
        %379 = vmatprep.subr.bf16.mxu0 0
        %380 = vmatpush1.bf16.msra.mxu0 0
        %381 = vmatprep.subr.bf16.mxu0 0
        %382 = vmatpush1.bf16.msra.mxu0 0
        %383 = vmatprep.subr.bf16.mxu0 0
        %384 = vmatpush1.bf16.msra.mxu0 0
        %385 = vmatprep.subr.bf16.mxu0 0
        %386 = vmatpush1.bf16.msra.mxu0 0
        %387 = vmatprep.subr.bf16.mxu0 0
        %388 = vmatpush1.bf16.msra.mxu0 0
        %389 = vmatprep.mubr.bf16.mxu0 0
        %390 = vmatmul.mubr.bf16.gmra.mrb[0].mxu0 %v285
        %v391 = vpop.f32.mrb[0].mxu0
        %v392 = vadd.f32 %v307, %v391
        %v393 = vpop.f32.mrb[0].mxu0
        %v394 = vpop.f32.mrb[0].mxu0
        %v395 = vpop.f32.mrb[0].mxu0
        %396 = vdwg.mxu0
        %397 = vst [vmem:[%s254] sm:$0xff] %v392
        %s398 = sand.u32 %s141, 1
        %s399 = scalar_lea.sflag [#allocation4], %s398
        %s400 = sand.u32 %s141, 1
        %s401 = smul.addr %s400, 8
        %s402 = scalar_lea.vmem [#allocation7], %s401
        // Predicated region
        $region49: #{tpu_custom_call.1} parent=39 // pred_check
          %p403 = pneg %p151
        $region50: #{tpu_custom_call.1} parent=39 // pred_check_branch
          %405 = sbr.rel (%p403) target = $region52
        $region51: #{tpu_custom_call.1} parent=39 // pred_region
          %s407 = ssub.s32 128, 128
          %408 = vsyncadd %s399, %s407
          %s409 = smul.addr %s23, 128
          %s410 = scalar_lea.hbm %s5, %s409
          %s412 = sshll.u32 %s402, 4
          %s413 = int_to_ptr.vmem [resolvable:$true] %s412
          %415 = dma.vmem_to_hbm [thread:$0]  %s413, 128, %s410, %s399
        $region52: #{tpu_custom_call.1} parent=39 // pred_fallthru
          _
      $region40: #{tpu_custom_call.1} parent=5 // pred_fallthru
        _
      %p416 = scmp.le.s32.totalorder 2, %s18
      // Predicated region
      $region53: #{tpu_custom_call.1} parent=5 // pred_check
        %p417 = pneg %p416
      $region54: #{tpu_custom_call.1} parent=5 // pred_check_branch
        %419 = sbr.rel (%p417) target = $region56
      $region55: #{tpu_custom_call.1} parent=5 // pred_region
        %s420 = ssub.s32 %s18, 2
        // Predicated region
        $region57: #{tpu_custom_call.1} parent=55 // pred_check
          %p421 = pneg %p157
        $region58: #{tpu_custom_call.1} parent=55 // pred_check_branch
          %423 = sbr.rel (%p421) target = $region60
        $region59: #{tpu_custom_call.1} parent=55 // pred_region
          %s424 = sand.u32 %s142, 1
          %s425 = scalar_lea.sflag [#allocation4], %s424
          %s426 = sand.u32 %s142, 1
          %s427 = smul.addr %s426, 8
          %s428 = scalar_lea.vmem [#allocation7], %s427
          %429 = dma.done %s425, 128
        $region60: #{tpu_custom_call.1} parent=55 // pred_fallthru
          _
      $region56: #{tpu_custom_call.1} parent=5 // pred_fallthru
        _
    $region6: #{tpu_custom_call.1} parent=1 // loop_footer
      %s22 = sadd.s32 1, %s18
    $region7: #{tpu_custom_call.1} parent=1 // loop_footer_branch
      %17 = sbr.rel target = $region3
    $region8: #{tpu_custom_call.1} parent=1 // loop_exit
      _
    %430 = vsyncpa [#allocation3], 1
    %s431 = scalar_lea.sflag [#allocation3], 1
    %432 = vsyncpa %s431, 1
    %433 = vsyncpa [#allocation6], 1
    %434 = vsyncpa [#allocation4], 1
    %s435 = scalar_lea.sflag [#allocation4], 1
    %436 = vsyncpa %s435, 1

</llo_original>
